<compile_context>
chip_gen: v7x
topology: tpu7x:2x2x1
jax: 0.10.0
libtpu: 0.0.40
codegen_flags: <defaults>
</compile_context>

<pallas_src>
import enum
from typing import Tuple

import jax
import jax.numpy as jnp
from jax.experimental import pallas as pl
from jax.experimental.pallas import tpu as pltpu


class SpaceTypes(enum.Enum):
    GRAY_2ch = 1
    GRAY_3ch = 2
    COLOR = 3
    IMAGE = 4


class BoxSpace:
    def __init__(self, shape: Tuple[int, ...], stype: SpaceTypes):
        self.shape = tuple(shape)
        self.stype = stype

    def __repr__(self):
        return f"BoxSpace(shape={self.shape}, stype={self.stype})"


# ---------------------------------------------------------------------------
# Pallas kernel: batched lane-dense transpose (TB, HW, C) -> (TB, C, HW)
# ---------------------------------------------------------------------------
def _bhwc_to_bchw_kernel(x_ref, o_ref):
    # x_ref: (TB, HW, C) VMEM tile, o_ref: (TB, C, HW) VMEM tile.
    # Minor-dim 2D transpose per image; XLU work overlaps with loads/stores.
    o_ref[...] = jnp.transpose(x_ref[...], (0, 2, 1))


def _pick_batch_tile(B: int, per_image_bytes: int) -> int:
    """Pick images-per-grid-step: a few MiB per tile, capped by B, and keep
    the grid >= 2 steps when possible (v7x 2-TC sharding of 'parallel')."""
    target_tile_bytes = 4 * 1024 * 1024  # ~4 MiB in, ~4 MiB out, x2 buffering
    tb = max(1, min(B, target_tile_bytes // max(per_image_bytes, 1)))
    if B >= 2 and pl.cdiv(B, tb) < 2:
        tb = pl.cdiv(B, 2)
    return tb


def nhwc_to_nchw(x: jax.Array) -> jax.Array:
    """x: (B, H, W, C) -> (B, C, H, W) via a Pallas kernel (any dtype)."""
    B, H, W, C = x.shape
    HW = H * W

    if C == 1:
        # NHWC with a single channel -> NCHW is a pure (free) reshape.
        return x.reshape(B, 1, H, W)

    itemsize = jnp.dtype(x.dtype).itemsize
    tb = _pick_batch_tile(B, HW * C * itemsize)
    grid_b = pl.cdiv(B, tb)
    padded_b = grid_b * tb

    x2 = x.reshape(B, HW, C)  # free metadata reshape
    if padded_b != B:
        # Pad the batch so the grid tiles evenly (tail block stays in-bounds).
        x2 = jnp.pad(x2, ((0, padded_b - B), (0, 0), (0, 0)))

    out = pl.pallas_call(
        _bhwc_to_bchw_kernel,
        out_shape=jax.ShapeDtypeStruct((padded_b, C, HW), x.dtype),
        grid_spec=pltpu.PrefetchScalarGridSpec(
            num_scalar_prefetch=0,
            grid=(grid_b,),
            # Only the batch axis is tiled; the last two dims of each block are
            # the full array extents, so the (8,128) constraint is satisfied
            # and the output trailing dim (HW) is lane-dense.
            in_specs=[pl.BlockSpec((tb, HW, C), lambda b: (b, 0, 0))],
            out_specs=pl.BlockSpec((tb, C, HW), lambda b: (b, 0, 0)),
        ),
        compiler_params=pltpu.CompilerParams(
            dimension_semantics=("parallel",),
        ),
        cost_estimate=pl.CostEstimate(
            flops=0,
            transcendentals=0,
            bytes_accessed=2 * padded_b * HW * C * itemsize,
        ),
    )(x2)

    if padded_b != B:
        out = out[:B]
    return out.reshape(B, C, H, W)


# ---------------------------------------------------------------------------
# JAX re-implementation of _InputImageBlock (dispatch glue + Pallas hot path)
# ---------------------------------------------------------------------------
class InputImageBlock:
    def __init__(self, obs_space: BoxSpace):
        self.obs_space = obs_space
        # mirror the PyTorch __init__: run a dummy forward to get out_shape
        dummy = jnp.zeros((1,) + obs_space.shape, dtype=jnp.float32)
        y = self(dummy)
        self.out_shape = y.shape[1:]

    def __call__(self, x: jax.Array) -> jax.Array:
        err_msg = f"unknown observation_type: {self.obs_space}"
        stype = self.obs_space.stype
        ndim_obs = len(self.obs_space.shape)

        if stype == SpaceTypes.GRAY_2ch:
            if ndim_obs == 2:
                # (B, H, W) -> (B, H, W, 1) -> (B, 1, H, W): pure reshape,
                # no HBM round trip needed.
                B, H, W = x.shape
                return x.reshape(B, 1, H, W)
            elif ndim_obs == 3:
                return x  # pass-through, matching the PyTorch branch
            else:
                raise ValueError(err_msg)
        elif stype == SpaceTypes.GRAY_3ch:
            assert self.obs_space.shape[-1] == 1
            if ndim_obs == 3:
                # (B, H, W, 1) -> (B, 1, H, W): single channel => pure reshape.
                B, H, W, _ = x.shape
                return x.reshape(B, 1, H, W)
            elif ndim_obs == 4:
                return x.reshape(x.shape[:4])
            else:
                raise ValueError(err_msg)
        elif stype == SpaceTypes.COLOR:
            if ndim_obs == 3:
                return nhwc_to_nchw(x)
            else:
                raise ValueError(err_msg)
        elif stype == SpaceTypes.IMAGE:
            if ndim_obs == 3:
                return nhwc_to_nchw(x)
            else:
                raise ValueError(err_msg)
        else:
            raise ValueError(err_msg)


if __name__ == "__main__":
    key = jax.random.PRNGKey(0)

    # COLOR observation: (H, W, C) = (16, 16, 4), batch = 2
    B, H, W, C = 2, 16, 16, 4
    obs_space = BoxSpace(shape=(H, W, C), stype=SpaceTypes.COLOR)
    block = InputImageBlock(obs_space)

    x = jax.random.normal(key, (B, H, W, C), dtype=jnp.float32)
    y = jax.block_until_ready(block(x))

    # correctness check against the pure-JAX reference of permute((0,3,1,2))
    ref = jnp.transpose(x, (0, 3, 1, 2))
    assert y.shape == (B, C, H, W), y.shape
    assert block.out_shape == (C, H, W), block.out_shape
    assert jnp.allclose(y, ref), "mismatch vs reference permute"

    # odd batch size exercises the padded-tail path
    x5 = jax.random.normal(key, (5, H, W, C), dtype=jnp.float32)
    y5 = jax.block_until_ready(block(x5))
    assert jnp.allclose(y5, jnp.transpose(x5, (0, 3, 1, 2)))

    # GRAY_2ch branch: pure-reshape fast path (no kernel)
    obs_space_g = BoxSpace(shape=(H, W), stype=SpaceTypes.GRAY_2ch)
    block_g = InputImageBlock(obs_space_g)
    xg = jax.random.normal(key, (B, H, W), dtype=jnp.float32)
    yg = jax.block_until_ready(block_g(xg))
    refg = jnp.transpose(xg.reshape(B, H, W, 1), (0, 3, 1, 2))
    assert yg.shape == (B, 1, H, W)
    assert jnp.allclose(yg, refg)

    # GRAY_3ch branch: single channel => pure reshape
    obs_space_g3 = BoxSpace(shape=(H, W, 1), stype=SpaceTypes.GRAY_3ch)
    block_g3 = InputImageBlock(obs_space_g3)
    xg3 = jax.random.normal(key, (B, H, W, 1), dtype=jnp.float32)
    yg3 = jax.block_until_ready(block_g3(xg3))
    assert jnp.allclose(yg3, jnp.transpose(xg3, (0, 3, 1, 2)))

    print("KERNEL_OK")
</pallas_src>

<mosaic_0001>
module attributes {stable_mosaic.version = 11 : i64} {
  func.func @_bhwc_to_bchw_kernel(%arg0: i32, %arg1: memref<1x256x4xf32, #tpu.memory_space<vmem>>, %arg2: memref<1x4x256xf32, #tpu.memory_space<vmem>>) attributes {dimension_semantics = [#tpu.dimension_semantics<parallel>], iteration_bounds = array<i64: 1>, scalar_prefetch = 0 : i64, scratch_operands = 0 : i64, tpu.core_type = #tpu.core_type<tc>, window_params = [{transform_indices = @transform_0, window_bounds = array<i64: 1, 256, 4>}, {transform_indices = @transform_1, window_bounds = array<i64: 1, 4, 256>}]} {
    %c0 = arith.constant 0 : index
    %c0_0 = arith.constant 0 : index
    %c0_1 = arith.constant 0 : index
    %0 = vector.load %arg1[%c0, %c0_0, %c0_1] : memref<1x256x4xf32, #tpu.memory_space<vmem>>, vector<1x256x4xf32>
    %1 = tpu.transpose %0, [0, 2, 1] : vector<1x256x4xf32> -> vector<1x4x256xf32>
    %c0_2 = arith.constant 0 : index
    %c0_3 = arith.constant 0 : index
    %c0_4 = arith.constant 0 : index
    %2 = vector.load %arg2[%c0_2, %c0_3, %c0_4] : memref<1x4x256xf32, #tpu.memory_space<vmem>>, vector<1x4x256xf32>
    tpu.vector_store %arg2[%c0_2, %c0_3, %c0_4], %1 {strides = array<i32>} : memref<1x4x256xf32, #tpu.memory_space<vmem>>, vector<1x4x256xf32>,
    return
  }
  func.func @transform_0(%arg0: i32) -> (i32, i32, i32) {
    %c0_i32 = arith.constant 0 : i32
    %c0_i32_0 = arith.constant 0 : i32
    %c0_i32_1 = arith.constant 0 : i32
    return %arg0, %c0_i32, %c0_i32_0 : i32, i32, i32
  }
  func.func @transform_1(%arg0: i32) -> (i32, i32, i32) {
    %c0_i32 = arith.constant 0 : i32
    %c0_i32_0 = arith.constant 0 : i32
    %c0_i32_1 = arith.constant 0 : i32
    return %arg0, %c0_i32, %c0_i32_0 : i32, i32, i32
  }
}

</mosaic_0001>

<llo_original>
// kernel: tpu_custom_call.1
$region0: #{tpu_custom_call.1}
  #allocation0 [shape = 'u32[]', space=smem, size = 0x4, offset = 0x4, fixed_abs, tag = 'smem constant byte address 0x4 - core index']
  #allocation1 [shape = 'u32[144,128]{1,0:T(1,128)}', space=vmem, size = 0x12000, scoped, tag = 'internal scratch']
  %s0 = inlined_call_operand.vmem [shape: f32[1,256,4], index: 0, kind: input, shape index: {}]
  %s1 = inlined_call_operand.hbm [shape: f32[1,4,256], index: 1, kind: output, shape index: {}]
  %s2 = sld [smem:[#allocation0]]
  $region14: #{tpu_custom_call.1} parent=0
    _
  %s4 = ssub.s32 1, %s2
  %s5 = scalar_select 0, %s4, %s2
  $region1: #{tpu_custom_call.1} parent=0
    #allocation2 [shape = 'u8[4096]{0}', space=vmem, size = 0x1000, scoped, tag = 'output window, operand 0, single buffered']
    #allocation3 [shape = 's32[1]{0}', space=sflag, size = 0x4, scoped, tag = 'scoped memory for tpu_custom_call.1']
    %6 = vsyncpa [#allocation3], 0
    // Predicated region
    $region2: #{tpu_custom_call.1} parent=1 // pred_check
      _
    $region3: #{tpu_custom_call.1} parent=1 // pred_check_branch
      %8 = sbr.rel (0) target = $region5
    $region4: #{tpu_custom_call.1} parent=1 // pred_region
      _
    $region5: #{tpu_custom_call.1} parent=1 // pred_fallthru
      _
    %v9 = vld [vmem:[%s0] sm:$0xff]
    %v10 = vld [vmem:[%s0 + $0x8] sm:$0xff]
    %v11 = vld [vmem:[%s0 + $0x10] sm:$0xff]
    %v12 = vld [vmem:[%s0 + $0x18] sm:$0xff]
    %v13 = vld [vmem:[%s0 + $0x20] sm:$0xff]
    %v14 = vld [vmem:[%s0 + $0x28] sm:$0xff]
    %v15 = vld [vmem:[%s0 + $0x30] sm:$0xff]
    %v16 = vld [vmem:[%s0 + $0x38] sm:$0xff]
    %v17 = vld [vmem:[%s0 + $0x40] sm:$0xff]
    %v18 = vld [vmem:[%s0 + $0x48] sm:$0xff]
    %v19 = vld [vmem:[%s0 + $0x50] sm:$0xff]
    %v20 = vld [vmem:[%s0 + $0x58] sm:$0xff]
    %v21 = vld [vmem:[%s0 + $0x60] sm:$0xff]
    %v22 = vld [vmem:[%s0 + $0x68] sm:$0xff]
    %v23 = vld [vmem:[%s0 + $0x70] sm:$0xff]
    %v24 = vld [vmem:[%s0 + $0x78] sm:$0xff]
    %v25 = vld [vmem:[%s0 + $0x80] sm:$0xff]
    %v26 = vld [vmem:[%s0 + $0x88] sm:$0xff]
    %v27 = vld [vmem:[%s0 + $0x90] sm:$0xff]
    %v28 = vld [vmem:[%s0 + $0x98] sm:$0xff]
    %v29 = vld [vmem:[%s0 + $0xa0] sm:$0xff]
    %v30 = vld [vmem:[%s0 + $0xa8] sm:$0xff]
    %v31 = vld [vmem:[%s0 + $0xb0] sm:$0xff]
    %v32 = vld [vmem:[%s0 + $0xb8] sm:$0xff]
    %v33 = vld [vmem:[%s0 + $0xc0] sm:$0xff]
    %v34 = vld [vmem:[%s0 + $0xc8] sm:$0xff]
    %v35 = vld [vmem:[%s0 + $0xd0] sm:$0xff]
    %v36 = vld [vmem:[%s0 + $0xd8] sm:$0xff]
    %v37 = vld [vmem:[%s0 + $0xe0] sm:$0xff]
    %v38 = vld [vmem:[%s0 + $0xe8] sm:$0xff]
    %v39 = vld [vmem:[%s0 + $0xf0] sm:$0xff]
    %v40 = vld [vmem:[%s0 + $0xf8] sm:$0xff]
    %41 = vxpose.xlu0.b32.start [1/16] %v9, 128
    %42 = vxpose.xlu0.b32.cont [2/16] %v10, 128
    %43 = vxpose.xlu0.b32.cont [3/16] %v11, 128
    %44 = vxpose.xlu0.b32.cont [4/16] %v12, 128
    %45 = vxpose.xlu0.b32.cont [5/16] %v13, 128
    %46 = vxpose.xlu0.b32.cont [6/16] %v14, 128
    %47 = vxpose.xlu0.b32.cont [7/16] %v15, 128
    %48 = vxpose.xlu0.b32.cont [8/16] %v16, 128
    %49 = vxpose.xlu0.b32.cont [9/16] %v17, 128
    %50 = vxpose.xlu0.b32.cont [10/16] %v18, 128
    %51 = vxpose.xlu0.b32.cont [11/16] %v19, 128
    %52 = vxpose.xlu0.b32.cont [12/16] %v20, 128
    %53 = vxpose.xlu0.b32.cont [13/16] %v21, 128
    %54 = vxpose.xlu0.b32.cont [14/16] %v22, 128
    %55 = vxpose.xlu0.b32.cont [15/16] %v23, 128
    %56 = vxpose.xlu0.b32.end [16/16] %v24, 128
    %v57 = vpop.trf.xlu0
    %v58 = vpop.trf.xlu0
    %v59 = vpop.trf.xlu0
    %v60 = vpop.trf.xlu0
    %v61 = vpop.trf.xlu0
    %v62 = vpop.trf.xlu0
    %v63 = vpop.trf.xlu0
    %v64 = vpop.trf.xlu0
    %v65 = vpop.trf.xlu0
    %v66 = vpop.trf.xlu0
    %v67 = vpop.trf.xlu0
    %v68 = vpop.trf.xlu0
    %v69 = vpop.trf.xlu0
    %v70 = vpop.trf.xlu0
    %v71 = vpop.trf.xlu0
    %v72 = vpop.trf.xlu0
    %73 = vxpose.xlu0.b32.start [1/16] %v25, 128
    %74 = vxpose.xlu0.b32.cont [2/16] %v26, 128
    %75 = vxpose.xlu0.b32.cont [3/16] %v27, 128
    %76 = vxpose.xlu0.b32.cont [4/16] %v28, 128
    %77 = vxpose.xlu0.b32.cont [5/16] %v29, 128
    %78 = vxpose.xlu0.b32.cont [6/16] %v30, 128
    %79 = vxpose.xlu0.b32.cont [7/16] %v31, 128
    %80 = vxpose.xlu0.b32.cont [8/16] %v32, 128
    %81 = vxpose.xlu0.b32.cont [9/16] %v33, 128
    %82 = vxpose.xlu0.b32.cont [10/16] %v34, 128
    %83 = vxpose.xlu0.b32.cont [11/16] %v35, 128
    %84 = vxpose.xlu0.b32.cont [12/16] %v36, 128
    %85 = vxpose.xlu0.b32.cont [13/16] %v37, 128
    %86 = vxpose.xlu0.b32.cont [14/16] %v38, 128
    %87 = vxpose.xlu0.b32.cont [15/16] %v39, 128
    %88 = vxpose.xlu0.b32.end [16/16] %v40, 128
    %v89 = vpop.trf.xlu0
    %v90 = vpop.trf.xlu0
    %v91 = vpop.trf.xlu0
    %v92 = vpop.trf.xlu0
    %v93 = vpop.trf.xlu0
    %v94 = vpop.trf.xlu0
    %v95 = vpop.trf.xlu0
    %v96 = vpop.trf.xlu0
    %v97 = vpop.trf.xlu0
    %v98 = vpop.trf.xlu0
    %v99 = vpop.trf.xlu0
    %v100 = vpop.trf.xlu0
    %v101 = vpop.trf.xlu0
    %v102 = vpop.trf.xlu0
    %v103 = vpop.trf.xlu0
    %v104 = vpop.trf.xlu0
    %v107 = vcombine.low %v57, %v89
    %109 = vst [vmem:[#allocation2] sm:$0xff] %v107
    // Predicated region
    $region6: #{tpu_custom_call.1} parent=1 // pred_check
      _
    $region7: #{tpu_custom_call.1} parent=1 // pred_check_branch
      %111 = sbr.rel (0) target = $region9
    $region8: #{tpu_custom_call.1} parent=1 // pred_region
      %s113 = ssub.s32 128, 128
      %114 = vsyncadd [#allocation3], %s113
      %s116 = sshll.u32 [#allocation2], 4
      %s117 = int_to_ptr.vmem [resolvable:$true] %s116
      %119 = dma.vmem_to_hbm [thread:$0]  %s117, 128, %s1, [#allocation3]
    $region9: #{tpu_custom_call.1} parent=1 // pred_fallthru
      _
    // Predicated region
    $region10: #{tpu_custom_call.1} parent=1 // pred_check
      _
    $region11: #{tpu_custom_call.1} parent=1 // pred_check_branch
      %121 = sbr.rel (0) target = $region13
    $region12: #{tpu_custom_call.1} parent=1 // pred_region
      %122 = dma.done [#allocation3], 128
    $region13: #{tpu_custom_call.1} parent=1 // pred_fallthru
      _
    %123 = vsyncpa [#allocation3], 1

</llo_original>
